<compile_context>
chip_gen: v5e
topology: v5e:2x2
jax: 0.10.0
libtpu: 0.0.40
codegen_flags: <defaults>
</compile_context>

<pallas_src>
import math
from functools import partial

import jax
import jax.numpy as jnp
from jax.experimental import pallas as pl
from jax.experimental.pallas import tpu as pltpu

LANE = 128
SUBLANE = 8
NEG_INF = -1e30  # finite "-inf" for padded class lanes (avoids inf-inf corner cases)


def _round_up(x, m):
    return (x + m - 1) // m * m


def dnn_kernel(x_ref, w1_ref, b1_ref, w2_ref, b2_ref, o_ref):
    # x_ref:  (TB, F)    f32  flattened input tile, read directly from HBM
    # w1_ref: (F,  MID)  bf16 fc1 weight, transposed (grid-invariant, VMEM-resident)
    # b1_ref: (1,  MID)  f32
    # w2_ref: (MID, Cp)  bf16 fc2 weight, transposed, lane-padded with zeros
    # b2_ref: (1,  Cp)   f32  pad lanes hold -1e30 so log_softmax ignores them
    # o_ref:  (TB, Cp)   f32  lane-dense log_softmax output tile
    x = x_ref[...].astype(jnp.bfloat16)  # cheap VPU cast; matmuls run on bf16 MXU path

    # fc1 + ReLU (bf16 MXU matmul, f32 accumulate)
    h = jnp.dot(x, w1_ref[...], preferred_element_type=jnp.float32) + b1_ref[...]
    h = jnp.maximum(h, 0.0)

    # fc2 (bf16 MXU matmul, f32 accumulate); padded class lanes end up ~ -1e30
    logits = jnp.dot(h.astype(w2_ref.dtype), w2_ref[...],
                     preferred_element_type=jnp.float32) + b2_ref[...]

    # log_softmax along the class dim (pad lanes contribute exp(-1e30) == 0)
    m = jnp.max(logits, axis=-1, keepdims=True)
    shifted = logits - m
    lse = jnp.log(jnp.sum(jnp.exp(shifted), axis=-1, keepdims=True))
    o_ref[...] = shifted - lse


def prepare_params(w1, b1, w2, b2):
    """One-time packing of torch-layout weights: transpose, pad, cast.

    w1: (MID, F), b1: (MID,), w2: (C, MID), b2: (C,).
    Call once; reuse the returned dict for every forward call.
    """
    mid, feat = w1.shape
    n_classes = w2.shape[0]
    c_p = _round_up(n_classes, LANE)

    w1_t = jnp.transpose(w1).astype(jnp.bfloat16)                 # (F, MID)
    b1_2d = b1.reshape(1, mid).astype(jnp.float32)

    w2_t = jnp.pad(jnp.transpose(w2), ((0, 0), (0, c_p - n_classes)))  # (MID, Cp)
    w2_t = w2_t.astype(jnp.bfloat16)
    b2_2d = jnp.full((1, c_p), NEG_INF, dtype=jnp.float32)
    b2_2d = b2_2d.at[0, :n_classes].set(b2.astype(jnp.float32))

    return dict(w1=w1_t, b1=b1_2d, w2=w2_t, b2=b2_2d,
                feat=feat, mid=mid, n_classes=n_classes, c_p=c_p)


def _vmem_budget(tb, feat, mid, c_p):
    # (2x double-buffered x tile + 2x double-buffered out tile + 1x resident weights)
    # with ~1.5x headroom + 1 MiB.  Clamp to <= 32 MiB: safe on v5e/v6e (128 MiB
    # physical) and within v7x's 64 MiB physical / 32 MiB default scoped VMEM.
    x_bytes = 2 * tb * feat * 4          # f32 input tiles
    o_bytes = 2 * tb * c_p * 4           # f32 output tiles
    w_bytes = feat * mid * 2 + mid * c_p * 2 + (mid + c_p) * 4
    need = int(1.5 * (x_bytes + o_bytes + w_bytes)) + (1 << 20)
    return int(min(max(need, 8 << 20), 32 << 20))


@partial(jax.jit, static_argnames=("tb",))
def _dnn_pallas(x_nchw, w1, b1, w2, b2, *, tb):
    n = x_nchw.shape[0]
    feat = math.prod(x_nchw.shape[1:])
    mid = w1.shape[1]
    c_p = w2.shape[1]

    # Flatten only (no pad, no cast) -- fused under jit, no extra HBM pass.
    x2d = x_nchw.reshape(n, feat).astype(jnp.float32)

    grid = (pl.cdiv(n, tb),)  # tail block masked by Pallas; garbage rows are row-local

    flops = 2 * n * (feat * mid + mid * c_p)
    bytes_accessed = (n * feat * 4           # x (f32, single pass)
                      + feat * mid * 2       # w1 (bf16)
                      + mid * c_p * 2        # w2 (bf16)
                      + (mid + c_p) * 4      # biases (f32)
                      + n * c_p * 4)         # output (f32)

    return pl.pallas_call(
        dnn_kernel,
        out_shape=jax.ShapeDtypeStruct((n, c_p), jnp.float32),
        grid_spec=pltpu.PrefetchScalarGridSpec(
            num_scalar_prefetch=0,
            grid=grid,
            in_specs=[
                pl.BlockSpec((tb, feat), lambda i: (i, 0)),     # x: batch-tiled
                pl.BlockSpec((feat, mid), lambda i: (0, 0)),    # w1: resident
                pl.BlockSpec((1, mid), lambda i: (0, 0)),       # b1: resident
                pl.BlockSpec((mid, c_p), lambda i: (0, 0)),     # w2: resident
                pl.BlockSpec((1, c_p), lambda i: (0, 0)),       # b2: resident
            ],
            out_specs=pl.BlockSpec((tb, c_p), lambda i: (i, 0)),
        ),
        compiler_params=pltpu.CompilerParams(
            dimension_semantics=("parallel",),   # megacore sharding on v7x
            vmem_limit_bytes=_vmem_budget(tb, feat, mid, c_p),
        ),
        cost_estimate=pl.CostEstimate(
            flops=flops,
            transcendentals=n * (c_p + 1),
            bytes_accessed=bytes_accessed,
        ),
    )(x2d, w1, b1, w2, b2)


def dnn_forward(x_nchw, params):
    """x_nchw: (N, in_dim, H, W) float.  Returns (N, n_classes) f32 log-probs."""
    n = x_nchw.shape[0]
    # Batch tile: multiple of 8 sublanes, capped at 1024 rows.  Big enough to
    # amortize per-grid-step overhead (~85%+ of HBM roofline), small enough to
    # fit the <=32 MiB scoped-VMEM budget on all of v5e/v6e/v7x.
    tb = int(min(1024, _round_up(n, SUBLANE)))
    out = _dnn_pallas(x_nchw, params["w1"], params["b1"],
                      params["w2"], params["b2"], tb=tb)
    # Drop tail-block garbage rows and padded class lanes.
    return out[:n, :params["n_classes"]]


def _ref_forward(x_nchw, w1, b1, w2, b2):
    """Pure-JAX f32 reference of the PyTorch forward."""
    n = x_nchw.shape[0]
    x = x_nchw.reshape(n, -1)
    h = jnp.maximum(x @ w1.T + b1, 0.0)
    logits = h @ w2.T + b2
    return jax.nn.log_softmax(logits, axis=1)


if __name__ == "__main__":
    # Small shapes consistent with the module: batch=2, in_dim=4, H=W=16,
    # mid_dim=128, n_classes=10.
    N, IN_DIM, H, W = 2, 4, 16, 16
    MID_DIM, N_CLASSES = 128, 10
    FEAT = IN_DIM * H * W

    key = jax.random.PRNGKey(0)
    kx, kw1, kb1, kw2, kb2 = jax.random.split(key, 5)

    x = jax.random.normal(kx, (N, IN_DIM, H, W), dtype=jnp.float32)

    # Deterministic parameter init (uniform like torch's default Linear init).
    bound1 = 1.0 / (FEAT ** 0.5)
    w1 = jax.random.uniform(kw1, (MID_DIM, FEAT), minval=-bound1, maxval=bound1,
                            dtype=jnp.float32)
    b1 = jax.random.uniform(kb1, (MID_DIM,), minval=-bound1, maxval=bound1,
                            dtype=jnp.float32)
    bound2 = 1.0 / (MID_DIM ** 0.5)
    w2 = jax.random.uniform(kw2, (N_CLASSES, MID_DIM), minval=-bound2, maxval=bound2,
                            dtype=jnp.float32)
    b2 = jax.random.uniform(kb2, (N_CLASSES,), minval=-bound2, maxval=bound2,
                            dtype=jnp.float32)

    # One-time weight packing (transpose / pad / bf16 cast), reused across calls.
    params = prepare_params(w1, b1, w2, b2)

    out = dnn_forward(x, params)
    out = jax.block_until_ready(out)

    ref = _ref_forward(x, w1, b1, w2, b2)
    assert out.shape == (N, N_CLASSES)
    # bf16 matmul inputs with f32 accumulation: allow small numeric drift vs f32 ref.
    assert jnp.allclose(out, ref, atol=5e-2, rtol=0.0), float(jnp.max(jnp.abs(out - ref)))
    # log_softmax rows must normalize.
    assert jnp.allclose(jnp.sum(jnp.exp(out), axis=1), 1.0, atol=1e-3)
    assert jnp.array_equal(jnp.argmax(out, axis=1), jnp.argmax(ref, axis=1))

    print("KERNEL_OK")
</pallas_src>

<mosaic_0001>
module attributes {stable_mosaic.version = 11 : i64} {
  func.func @dnn_kernel(%arg0: i32, %arg1: memref<8x1024xf32, #tpu.memory_space<vmem>>, %arg2: memref<1024x128xbf16, #tpu.memory_space<vmem>>, %arg3: memref<1x128xf32, #tpu.memory_space<vmem>>, %arg4: memref<128x128xbf16, #tpu.memory_space<vmem>>, %arg5: memref<1x128xf32, #tpu.memory_space<vmem>>, %arg6: memref<8x128xf32, #tpu.memory_space<vmem>>) attributes {dimension_semantics = [#tpu.dimension_semantics<parallel>], iteration_bounds = array<i64: 1>, scalar_prefetch = 0 : i64, scratch_operands = 0 : i64, tpu.core_type = #tpu.core_type<tc>, window_params = [{transform_indices = @transform_0, window_bounds = array<i64: 8, 1024>}, {pipeline_mode = #tpu.pipeline_mode<synchronous>, transform_indices = @transform_1, window_bounds = array<i64: 1024, 128>}, {pipeline_mode = #tpu.pipeline_mode<synchronous>, transform_indices = @transform_2, window_bounds = array<i64: 1, 128>}, {pipeline_mode = #tpu.pipeline_mode<synchronous>, transform_indices = @transform_3, window_bounds = array<i64: 128, 128>}, {pipeline_mode = #tpu.pipeline_mode<synchronous>, transform_indices = @transform_4, window_bounds = array<i64: 1, 128>}, {transform_indices = @transform_5, window_bounds = array<i64: 8, 128>}]} {
    %c0 = arith.constant 0 : index
    %c0_0 = arith.constant 0 : index
    %0 = vector.load %arg1[%c0, %c0_0] : memref<8x1024xf32, #tpu.memory_space<vmem>>, vector<8x1024xf32>
    %1 = arith.truncf %0 : vector<8x1024xf32> to vector<8x1024xbf16>
    %c0_1 = arith.constant 0 : index
    %c0_2 = arith.constant 0 : index
    %2 = vector.load %arg2[%c0_1, %c0_2] : memref<1024x128xbf16, #tpu.memory_space<vmem>>, vector<1024x128xbf16>
    %cst = arith.constant dense<0.000000e+00> : vector<8x128xf32>
    %3 = tpu.matmul %1, %2, %cst {dimension_numbers = #tpu.dot_dimension_numbers<[1], [0], [0], [1], [0, 0, 1, 1], [], []>} : vector<8x1024xbf16>, vector<1024x128xbf16>, vector<8x128xf32> -> vector<8x128xf32>
    %c0_3 = arith.constant 0 : index
    %c0_4 = arith.constant 0 : index
    %4 = vector.load %arg3[%c0_3, %c0_4] : memref<1x128xf32, #tpu.memory_space<vmem>>, vector<1x128xf32>
    %5 = vector.broadcast %4 : vector<1x128xf32> to vector<8x128xf32>
    %6 = arith.addf %3, %5 : vector<8x128xf32>
    %cst_5 = arith.constant 0.000000e+00 : f32
    %7 = vector.broadcast %cst_5 : f32 to vector<8x128xf32>
    %8 = arith.maximumf %6, %7 : vector<8x128xf32>
    %9 = arith.truncf %8 : vector<8x128xf32> to vector<8x128xbf16>
    %c0_6 = arith.constant 0 : index
    %c0_7 = arith.constant 0 : index
    %10 = vector.load %arg4[%c0_6, %c0_7] : memref<128x128xbf16, #tpu.memory_space<vmem>>, vector<128x128xbf16>
    %cst_8 = arith.constant dense<0.000000e+00> : vector<8x128xf32>
    %11 = tpu.matmul %9, %10, %cst_8 {dimension_numbers = #tpu.dot_dimension_numbers<[1], [0], [0], [1], [0, 0, 1, 1], [], []>} : vector<8x128xbf16>, vector<128x128xbf16>, vector<8x128xf32> -> vector<8x128xf32>
    %c0_9 = arith.constant 0 : index
    %c0_10 = arith.constant 0 : index
    %12 = vector.load %arg5[%c0_9, %c0_10] : memref<1x128xf32, #tpu.memory_space<vmem>>, vector<1x128xf32>
    %13 = vector.broadcast %12 : vector<1x128xf32> to vector<8x128xf32>
    %14 = arith.addf %11, %13 : vector<8x128xf32>
    %cst_11 = arith.constant dense<0xFF800000> : vector<8xf32>
    %15 = vector.multi_reduction <maximumf>, %14, %cst_11 [1] : vector<8x128xf32> to vector<8xf32>
    %16 = vector.shape_cast %15 : vector<8xf32> to vector<8x1xf32>
    %17 = vector.broadcast %16 : vector<8x1xf32> to vector<8x128xf32>
    %18 = arith.subf %14, %17 : vector<8x128xf32>
    %19 = math.exp %18 : vector<8x128xf32>
    %cst_12 = arith.constant dense<0.000000e+00> : vector<8xf32>
    %20 = vector.multi_reduction <add>, %19, %cst_12 [1] : vector<8x128xf32> to vector<8xf32>
    %21 = vector.shape_cast %20 : vector<8xf32> to vector<8x1xf32>
    %22 = math.log %21 : vector<8x1xf32>
    %23 = vector.broadcast %22 : vector<8x1xf32> to vector<8x128xf32>
    %24 = arith.subf %18, %23 : vector<8x128xf32>
    %c0_13 = arith.constant 0 : index
    %c0_14 = arith.constant 0 : index
    %25 = vector.load %arg6[%c0_13, %c0_14] : memref<8x128xf32, #tpu.memory_space<vmem>>, vector<8x128xf32>
    tpu.vector_store %arg6[%c0_13, %c0_14], %24 {strides = array<i32>} : memref<8x128xf32, #tpu.memory_space<vmem>>, vector<8x128xf32>,
    return
  }
  func.func @transform_0(%arg0: i32) -> (i32, i32) {
    %c0_i32 = arith.constant 0 : i32
    %c0_i32_0 = arith.constant 0 : i32
    return %arg0, %c0_i32 : i32, i32
  }
  func.func @transform_1(%arg0: i32) -> (i32, i32) {
    %c0_i32 = arith.constant 0 : i32
    %c0_i32_0 = arith.constant 0 : i32
    %c0_i32_1 = arith.constant 0 : i32
    return %c0_i32, %c0_i32_0 : i32, i32
  }
  func.func @transform_2(%arg0: i32) -> (i32, i32) {
    %c0_i32 = arith.constant 0 : i32
    %c0_i32_0 = arith.constant 0 : i32
    %c0_i32_1 = arith.constant 0 : i32
    return %c0_i32, %c0_i32_0 : i32, i32
  }
  func.func @transform_3(%arg0: i32) -> (i32, i32) {
    %c0_i32 = arith.constant 0 : i32
    %c0_i32_0 = arith.constant 0 : i32
    %c0_i32_1 = arith.constant 0 : i32
    return %c0_i32, %c0_i32_0 : i32, i32
  }
  func.func @transform_4(%arg0: i32) -> (i32, i32) {
    %c0_i32 = arith.constant 0 : i32
    %c0_i32_0 = arith.constant 0 : i32
    %c0_i32_1 = arith.constant 0 : i32
    return %c0_i32, %c0_i32_0 : i32, i32
  }
  func.func @transform_5(%arg0: i32) -> (i32, i32) {
    %c0_i32 = arith.constant 0 : i32
    %c0_i32_0 = arith.constant 0 : i32
    return %arg0, %c0_i32 : i32, i32
  }
}

</mosaic_0001>

<llo_original>
// kernel: _dnn_pallas.1
$region0: #{_dnn_pallas.1}
  #allocation0 [shape = 'u32[]', space=smem, size = 0x4, offset = 0x4, fixed_abs, tag = 'smem constant byte address 0x4 - core index']
  #allocation1 [shape = 'u32[72,128]{1,0:T(1,128)}', space=vmem, size = 0x9000, scoped, tag = 'internal scratch']
  %s0 = inlined_call_operand.vmem [shape: f32[2,1024], index: 0, kind: input, shape index: {}]
  %s1 = inlined_call_operand.hbm [shape: bf16[1024,128], index: 1, kind: input, shape index: {}]
  %s2 = inlined_call_operand.vmem [shape: f32[1,128], index: 2, kind: input, shape index: {}]
  %s3 = inlined_call_operand.vmem [shape: bf16[128,128], index: 3, kind: input, shape index: {}]
  %s4 = inlined_call_operand.vmem [shape: f32[1,128], index: 4, kind: input, shape index: {}]
  %s5 = inlined_call_operand.hbm [shape: f32[2,128], index: 5, kind: output, shape index: {}]
  %s6 = sld [smem:[#allocation0]]
  $region34: #{_dnn_pallas.1} parent=0
    _
  %s8 = ssub.s32 1, %s6
  %s9 = scalar_select 0, %s8, %s6
  $region1: #{_dnn_pallas.1} parent=0
    #allocation2 [shape = 'u8[262144]{0}', space=vmem, size = 0x40000, scoped, tag = 'input window, operand 1, single buffered']
    #allocation3 [shape = 's32[1]{0}', space=sflag, size = 0x4, scoped, tag = 'scoped memory for _dnn_pallas.1']
    #allocation4 [shape = 's32[1]{0}', space=sflag, size = 0x4, scoped, tag = 'scoped memory for _dnn_pallas.1']
    #allocation5 [shape = 'u8[4096]{0}', space=vmem, size = 0x1000, scoped, tag = 'output window, operand 0, single buffered']
    %10 = vsyncpa [#allocation3], 0
    %11 = vsyncpa [#allocation4], 0
    // Predicated region
    $region2: #{_dnn_pallas.1} parent=1 // pred_check
      _
    $region3: #{_dnn_pallas.1} parent=1 // pred_check_branch
      %13 = sbr.rel (0) target = $region5
    $region4: #{_dnn_pallas.1} parent=1 // pred_region
      _
    $region5: #{_dnn_pallas.1} parent=1 // pred_fallthru
      _
    // Predicated region
    $region6: #{_dnn_pallas.1} parent=1 // pred_check
      _
    $region7: #{_dnn_pallas.1} parent=1 // pred_check_branch
      %15 = sbr.rel (0) target = $region9
    $region8: #{_dnn_pallas.1} parent=1 // pred_region
      %17 = vsyncadd [#allocation3], 0
      %s18 = sshll.u32 %s1, 4
      %s19 = int_to_ptr.hbm [resolvable:$true] %s18
      %s20 = sshll.u32 [#allocation2], 4
      %s21 = int_to_ptr.vmem [resolvable:$true] %s20
      %26 = dma.hbm_to_vmem [thread:$0]  %s19, 8192, %s21, [#allocation3], 64, 64, 4
    $region9: #{_dnn_pallas.1} parent=1 // pred_fallthru
      _
    // Predicated region
    $region10: #{_dnn_pallas.1} parent=1 // pred_check
      _
    $region11: #{_dnn_pallas.1} parent=1 // pred_check_branch
      %28 = sbr.rel (0) target = $region13
    $region12: #{_dnn_pallas.1} parent=1 // pred_region
      _
    $region13: #{_dnn_pallas.1} parent=1 // pred_fallthru
      _
    // Predicated region
    $region14: #{_dnn_pallas.1} parent=1 // pred_check
      _
    $region15: #{_dnn_pallas.1} parent=1 // pred_check_branch
      %30 = sbr.rel (0) target = $region17
    $region16: #{_dnn_pallas.1} parent=1 // pred_region
      _
    $region17: #{_dnn_pallas.1} parent=1 // pred_fallthru
      _
    // Predicated region
    $region18: #{_dnn_pallas.1} parent=1 // pred_check
      _
    $region19: #{_dnn_pallas.1} parent=1 // pred_check_branch
      %32 = sbr.rel (0) target = $region21
    $region20: #{_dnn_pallas.1} parent=1 // pred_region
      _
    $region21: #{_dnn_pallas.1} parent=1 // pred_fallthru
      _
    // Predicated region
    $region22: #{_dnn_pallas.1} parent=1 // pred_check
      _
    $region23: #{_dnn_pallas.1} parent=1 // pred_check_branch
      %34 = sbr.rel (0) target = $region25
    $region24: #{_dnn_pallas.1} parent=1 // pred_region
      %36 = dma.done [#allocation3], 8192
    $region25: #{_dnn_pallas.1} parent=1 // pred_fallthru
      _
    %v37 = vld [vmem:[%s0] sm:$0xff]
    %v38 = vld [vmem:[%s0 + $0x8] sm:$0xff]
    %v39 = vld [vmem:[%s0 + $0x10] sm:$0xff]
    %v40 = vld [vmem:[%s0 + $0x18] sm:$0xff]
    %v41 = vld [vmem:[%s0 + $0x20] sm:$0xff]
    %v42 = vld [vmem:[%s0 + $0x28] sm:$0xff]
    %v43 = vld [vmem:[%s0 + $0x30] sm:$0xff]
    %v44 = vld [vmem:[%s0 + $0x38] sm:$0xff]
    %53 = vst [vmem:[#allocation1] ss:$4 sm:$0xff] %v37
    %s54 = scalar_lea.vmem [#allocation1], 1
    %55 = vst [vmem:[%s54] ss:$4 sm:$0xff] %v39
    %s56 = scalar_lea.vmem [#allocation1], 2
    %57 = vst [vmem:[%s56] ss:$4 sm:$0xff] %v41
    %s58 = scalar_lea.vmem [#allocation1], 3
    %59 = vst [vmem:[%s58] ss:$4 sm:$0xff] %v43
    %s60 = scalar_lea.vmem [#allocation1], 32
    %61 = vst [vmem:[%s60] ss:$4 sm:$0xff] %v38
    %s62 = scalar_lea.vmem [#allocation1], 33
    %63 = vst [vmem:[%s62] ss:$4 sm:$0xff] %v40
    %s64 = scalar_lea.vmem [#allocation1], 34
    %65 = vst [vmem:[%s64] ss:$4 sm:$0xff] %v42
    %s66 = scalar_lea.vmem [#allocation1], 35
    %67 = vst [vmem:[%s66] ss:$4 sm:$0xff] %v44
    %v68 = vld.sshfl [vmem:[#allocation1] sm:$0xff pattern:$0x73625140]
    %v69 = vld.sshfl [vmem:[#allocation1 + $0x8] sm:$0xff pattern:$0x73625140]
    %v70 = vld.sshfl [vmem:[#allocation1 + $0x10] sm:$0xff pattern:$0x73625140]
    %v71 = vld.sshfl [vmem:[#allocation1 + $0x18] sm:$0xff pattern:$0x73625140]
    %v72 = vld.sshfl [vmem:[#allocation1 + $0x20] sm:$0xff pattern:$0x73625140]
    %v73 = vld.sshfl [vmem:[#allocation1 + $0x28] sm:$0xff pattern:$0x73625140]
    %v74 = vld.sshfl [vmem:[#allocation1 + $0x30] sm:$0xff pattern:$0x73625140]
    %v75 = vld.sshfl [vmem:[#allocation1 + $0x38] sm:$0xff pattern:$0x73625140]
    %v84 = vpack.c.bf16 %v68, %v68
    %v85 = vpack.c.bf16 %v69, %v69
    %v86 = vpack.c.bf16 %v70, %v70
    %v87 = vpack.c.bf16 %v71, %v71
    %v88 = vpack.c.bf16 %v72, %v72
    %v89 = vpack.c.bf16 %v73, %v73
    %v90 = vpack.c.bf16 %v74, %v74
    %v91 = vpack.c.bf16 %v75, %v75
    %v92 = vld [vmem:[#allocation2] sm:$0xf]
    %v93 = vld [vmem:[#allocation2 + $0x4] sm:$0xf]
    %v94 = vld [vmem:[#allocation2 + $0x8] sm:$0xf]
    %v95 = vld [vmem:[#allocation2 + $0xc] sm:$0xf]
    %v96 = vld [vmem:[#allocation2 + $0x10] sm:$0xf]
    %v97 = vld [vmem:[#allocation2 + $0x14] sm:$0xf]
    %v98 = vld [vmem:[#allocation2 + $0x18] sm:$0xf]
    %v99 = vld [vmem:[#allocation2 + $0x1c] sm:$0xf]
    %v100 = vld [vmem:[#allocation2 + $0x20] sm:$0xf]
    %v101 = vld [vmem:[#allocation2 + $0x24] sm:$0xf]
    %v102 = vld [vmem:[#allocation2 + $0x28] sm:$0xf]
    %v103 = vld [vmem:[#allocation2 + $0x2c] sm:$0xf]
    %v104 = vld [vmem:[#allocation2 + $0x30] sm:$0xf]
    %v105 = vld [vmem:[#allocation2 + $0x34] sm:$0xf]
    %v106 = vld [vmem:[#allocation2 + $0x38] sm:$0xf]
    %v107 = vld [vmem:[#allocation2 + $0x3c] sm:$0xf]
    %v108 = vld [vmem:[#allocation2 + $0x40] sm:$0xf]
    %v109 = vld [vmem:[#allocation2 + $0x44] sm:$0xf]
    %v110 = vld [vmem:[#allocation2 + $0x48] sm:$0xf]
    %v111 = vld [vmem:[#allocation2 + $0x4c] sm:$0xf]
    %v112 = vld [vmem:[#allocation2 + $0x50] sm:$0xf]
    %v113 = vld [vmem:[#allocation2 + $0x54] sm:$0xf]
    %v114 = vld [vmem:[#allocation2 + $0x58] sm:$0xf]
    %v115 = vld [vmem:[#allocation2 + $0x5c] sm:$0xf]
    %v116 = vld [vmem:[#allocation2 + $0x60] sm:$0xf]
    %v117 = vld [vmem:[#allocation2 + $0x64] sm:$0xf]
    %v118 = vld [vmem:[#allocation2 + $0x68] sm:$0xf]
    %v119 = vld [vmem:[#allocation2 + $0x6c] sm:$0xf]
    %v120 = vld [vmem:[#allocation2 + $0x70] sm:$0xf]
    %v121 = vld [vmem:[#allocation2 + $0x74] sm:$0xf]
    %v122 = vld [vmem:[#allocation2 + $0x78] sm:$0xf]
    %v123 = vld [vmem:[#allocation2 + $0x7c] sm:$0xf]
    %v124 = vld [vmem:[#allocation2 + $0x80] sm:$0xf]
    %v125 = vld [vmem:[#allocation2 + $0x84] sm:$0xf]
    %v126 = vld [vmem:[#allocation2 + $0x88] sm:$0xf]
    %v127 = vld [vmem:[#allocation2 + $0x8c] sm:$0xf]
    %v128 = vld [vmem:[#allocation2 + $0x90] sm:$0xf]
    %v129 = vld [vmem:[#allocation2 + $0x94] sm:$0xf]
    %v130 = vld [vmem:[#allocation2 + $0x98] sm:$0xf]
    %v131 = vld [vmem:[#allocation2 + $0x9c] sm:$0xf]
    %v132 = vld [vmem:[#allocation2 + $0xa0] sm:$0xf]
    %v133 = vld [vmem:[#allocation2 + $0xa4] sm:$0xf]
    %v134 = vld [vmem:[#allocation2 + $0xa8] sm:$0xf]
    %v135 = vld [vmem:[#allocation2 + $0xac] sm:$0xf]
    %v136 = vld [vmem:[#allocation2 + $0xb0] sm:$0xf]
    %v137 = vld [vmem:[#allocation2 + $0xb4] sm:$0xf]
    %v138 = vld [vmem:[#allocation2 + $0xb8] sm:$0xf]
    %v139 = vld [vmem:[#allocation2 + $0xbc] sm:$0xf]
    %v140 = vld [vmem:[#allocation2 + $0xc0] sm:$0xf]
    %v141 = vld [vmem:[#allocation2 + $0xc4] sm:$0xf]
    %v142 = vld [vmem:[#allocation2 + $0xc8] sm:$0xf]
    %v143 = vld [vmem:[#allocation2 + $0xcc] sm:$0xf]
    %v144 = vld [vmem:[#allocation2 + $0xd0] sm:$0xf]
    %v145 = vld [vmem:[#allocation2 + $0xd4] sm:$0xf]
    %v146 = vld [vmem:[#allocation2 + $0xd8] sm:$0xf]
    %v147 = vld [vmem:[#allocation2 + $0xdc] sm:$0xf]
    %v148 = vld [vmem:[#allocation2 + $0xe0] sm:$0xf]
    %v149 = vld [vmem:[#allocation2 + $0xe4] sm:$0xf]
    %v150 = vld [vmem:[#allocation2 + $0xe8] sm:$0xf]
    %v151 = vld [vmem:[#allocation2 + $0xec] sm:$0xf]
    %v152 = vld [vmem:[#allocation2 + $0xf0] sm:$0xf]
    %v153 = vld [vmem:[#allocation2 + $0xf4] sm:$0xf]
    %v154 = vld [vmem:[#allocation2 + $0xf8] sm:$0xf]
    %v155 = vld [vmem:[#allocation2 + $0xfc] sm:$0xf]
    %v156 = vld [vmem:[#allocation2 + $0x100] sm:$0xf]
    %v157 = vld [vmem:[#allocation2 + $0x104] sm:$0xf]
    %v158 = vld [vmem:[#allocation2 + $0x108] sm:$0xf]
    %v159 = vld [vmem:[#allocation2 + $0x10c] sm:$0xf]
    %v160 = vld [vmem:[#allocation2 + $0x110] sm:$0xf]
    %v161 = vld [vmem:[#allocation2 + $0x114] sm:$0xf]
    %v162 = vld [vmem:[#allocation2 + $0x118] sm:$0xf]
    %v163 = vld [vmem:[#allocation2 + $0x11c] sm:$0xf]
    %v164 = vld [vmem:[#allocation2 + $0x120] sm:$0xf]
    %v165 = vld [vmem:[#allocation2 + $0x124] sm:$0xf]
    %v166 = vld [vmem:[#allocation2 + $0x128] sm:$0xf]
    %v167 = vld [vmem:[#allocation2 + $0x12c] sm:$0xf]
    %v168 = vld [vmem:[#allocation2 + $0x130] sm:$0xf]
    %v169 = vld [vmem:[#allocation2 + $0x134] sm:$0xf]
    %v170 = vld [vmem:[#allocation2 + $0x138] sm:$0xf]
    %v171 = vld [vmem:[#allocation2 + $0x13c] sm:$0xf]
    %v172 = vld [vmem:[#allocation2 + $0x140] sm:$0xf]
    %v173 = vld [vmem:[#allocation2 + $0x144] sm:$0xf]
    %v174 = vld [vmem:[#allocation2 + $0x148] sm:$0xf]
    %v175 = vld [vmem:[#allocation2 + $0x14c] sm:$0xf]
    %v176 = vld [vmem:[#allocation2 + $0x150] sm:$0xf]
    %v177 = vld [vmem:[#allocation2 + $0x154] sm:$0xf]
    %v178 = vld [vmem:[#allocation2 + $0x158] sm:$0xf]
    %v179 = vld [vmem:[#allocation2 + $0x15c] sm:$0xf]
    %v180 = vld [vmem:[#allocation2 + $0x160] sm:$0xf]
    %v181 = vld [vmem:[#allocation2 + $0x164] sm:$0xf]
    %v182 = vld [vmem:[#allocation2 + $0x168] sm:$0xf]
    %v183 = vld [vmem:[#allocation2 + $0x16c] sm:$0xf]
    %v184 = vld [vmem:[#allocation2 + $0x170] sm:$0xf]
    %v185 = vld [vmem:[#allocation2 + $0x174] sm:$0xf]
    %v186 = vld [vmem:[#allocation2 + $0x178] sm:$0xf]
    %v187 = vld [vmem:[#allocation2 + $0x17c] sm:$0xf]
    %v188 = vld [vmem:[#allocation2 + $0x180] sm:$0xf]
    %v189 = vld [vmem:[#allocation2 + $0x184] sm:$0xf]
    %v190 = vld [vmem:[#allocation2 + $0x188] sm:$0xf]
    %v191 = vld [vmem:[#allocation2 + $0x18c] sm:$0xf]
    %v192 = vld [vmem:[#allocation2 + $0x190] sm:$0xf]
    %v193 = vld [vmem:[#allocation2 + $0x194] sm:$0xf]
    %v194 = vld [vmem:[#allocation2 + $0x198] sm:$0xf]
    %v195 = vld [vmem:[#allocation2 + $0x19c] sm:$0xf]
    %v196 = vld [vmem:[#allocation2 + $0x1a0] sm:$0xf]
    %v197 = vld [vmem:[#allocation2 + $0x1a4] sm:$0xf]
    %v198 = vld [vmem:[#allocation2 + $0x1a8] sm:$0xf]
    %v199 = vld [vmem:[#allocation2 + $0x1ac] sm:$0xf]
    %v200 = vld [vmem:[#allocation2 + $0x1b0] sm:$0xf]
    %v201 = vld [vmem:[#allocation2 + $0x1b4] sm:$0xf]
    %v202 = vld [vmem:[#allocation2 + $0x1b8] sm:$0xf]
    %v203 = vld [vmem:[#allocation2 + $0x1bc] sm:$0xf]
    %v204 = vld [vmem:[#allocation2 + $0x1c0] sm:$0xf]
    %v205 = vld [vmem:[#allocation2 + $0x1c4] sm:$0xf]
    %v206 = vld [vmem:[#allocation2 + $0x1c8] sm:$0xf]
    %v207 = vld [vmem:[#allocation2 + $0x1cc] sm:$0xf]
    %v208 = vld [vmem:[#allocation2 + $0x1d0] sm:$0xf]
    %v209 = vld [vmem:[#allocation2 + $0x1d4] sm:$0xf]
    %v210 = vld [vmem:[#allocation2 + $0x1d8] sm:$0xf]
    %v211 = vld [vmem:[#allocation2 + $0x1dc] sm:$0xf]
    %v212 = vld [vmem:[#allocation2 + $0x1e0] sm:$0xf]
    %v213 = vld [vmem:[#allocation2 + $0x1e4] sm:$0xf]
    %v214 = vld [vmem:[#allocation2 + $0x1e8] sm:$0xf]
    %v215 = vld [vmem:[#allocation2 + $0x1ec] sm:$0xf]
    %v216 = vld [vmem:[#allocation2 + $0x1f0] sm:$0xf]
    %v217 = vld [vmem:[#allocation2 + $0x1f4] sm:$0xf]
    %v218 = vld [vmem:[#allocation2 + $0x1f8] sm:$0xf]
    %v219 = vld [vmem:[#allocation2 + $0x1fc] sm:$0xf]
    %v220 = vld [vmem:[%s2] sm:$0x1]
    %v222 = vperm.slane %v220, 0
    %v352 = vunpack.c.l.b16 %v92
    %v353 = vunpack.c.l.b16 %v93
    %v354 = vunpack.c.l.b16 %v94
    %v355 = vunpack.c.l.b16 %v95
    %v356 = vunpack.c.l.b16 %v96
    %v357 = vunpack.c.l.b16 %v97
    %v358 = vunpack.c.l.b16 %v98
    %v359 = vunpack.c.l.b16 %v99
    %v360 = vunpack.c.l.b16 %v100
    %v361 = vunpack.c.l.b16 %v101
    %v362 = vunpack.c.l.b16 %v102
    %v363 = vunpack.c.l.b16 %v103
    %v364 = vunpack.c.l.b16 %v104
    %v365 = vunpack.c.l.b16 %v105
    %v366 = vunpack.c.l.b16 %v106
    %v367 = vunpack.c.l.b16 %v107
    %v368 = vunpack.c.l.b16 %v108
    %v369 = vunpack.c.l.b16 %v109
    %v370 = vunpack.c.l.b16 %v110
    %v371 = vunpack.c.l.b16 %v111
    %v372 = vunpack.c.l.b16 %v112
    %v373 = vunpack.c.l.b16 %v113
    %v374 = vunpack.c.l.b16 %v114
    %v375 = vunpack.c.l.b16 %v115
    %v376 = vunpack.c.l.b16 %v116
    %v377 = vunpack.c.l.b16 %v117
    %v378 = vunpack.c.l.b16 %v118
    %v379 = vunpack.c.l.b16 %v119
    %v380 = vunpack.c.l.b16 %v120
    %v381 = vunpack.c.l.b16 %v121
    %v382 = vunpack.c.l.b16 %v122
    %v383 = vunpack.c.l.b16 %v123
    %v384 = vunpack.c.l.b16 %v124
    %v385 = vunpack.c.l.b16 %v125
    %v386 = vunpack.c.l.b16 %v126
    %v387 = vunpack.c.l.b16 %v127
    %v388 = vunpack.c.l.b16 %v128
    %v389 = vunpack.c.l.b16 %v129
    %v390 = vunpack.c.l.b16 %v130
    %v391 = vunpack.c.l.b16 %v131
    %v392 = vunpack.c.l.b16 %v132
    %v393 = vunpack.c.l.b16 %v133
    %v394 = vunpack.c.l.b16 %v134
    %v395 = vunpack.c.l.b16 %v135
    %v396 = vunpack.c.l.b16 %v136
    %v397 = vunpack.c.l.b16 %v137
    %v398 = vunpack.c.l.b16 %v138
    %v399 = vunpack.c.l.b16 %v139
    %v400 = vunpack.c.l.b16 %v140
    %v401 = vunpack.c.l.b16 %v141
    %v402 = vunpack.c.l.b16 %v142
    %v403 = vunpack.c.l.b16 %v143
    %v404 = vunpack.c.l.b16 %v144
    %v405 = vunpack.c.l.b16 %v145
    %v406 = vunpack.c.l.b16 %v146
    %v407 = vunpack.c.l.b16 %v147
    %v408 = vunpack.c.l.b16 %v148
    %v409 = vunpack.c.l.b16 %v149
    %v410 = vunpack.c.l.b16 %v150
    %v411 = vunpack.c.l.b16 %v151
    %v412 = vunpack.c.l.b16 %v152
    %v413 = vunpack.c.l.b16 %v153
    %v414 = vunpack.c.l.b16 %v154
    %v415 = vunpack.c.l.b16 %v155
    %v416 = vunpack.c.l.b16 %v156
    %v417 = vunpack.c.l.b16 %v157
    %v418 = vunpack.c.l.b16 %v158
    %v419 = vunpack.c.l.b16 %v159
    %v420 = vunpack.c.l.b16 %v160
    %v421 = vunpack.c.l.b16 %v161
    %v422 = vunpack.c.l.b16 %v162
    %v423 = vunpack.c.l.b16 %v163
    %v424 = vunpack.c.l.b16 %v164
    %v425 = vunpack.c.l.b16 %v165
    %v426 = vunpack.c.l.b16 %v166
    %v427 = vunpack.c.l.b16 %v167
    %v428 = vunpack.c.l.b16 %v168
    %v429 = vunpack.c.l.b16 %v169
    %v430 = vunpack.c.l.b16 %v170
    %v431 = vunpack.c.l.b16 %v171
    %v432 = vunpack.c.l.b16 %v172
    %v433 = vunpack.c.l.b16 %v173
    %v434 = vunpack.c.l.b16 %v174
    %v435 = vunpack.c.l.b16 %v175
    %v436 = vunpack.c.l.b16 %v176
    %v437 = vunpack.c.l.b16 %v177
    %v438 = vunpack.c.l.b16 %v178
    %v439 = vunpack.c.l.b16 %v179
    %v440 = vunpack.c.l.b16 %v180
    %v441 = vunpack.c.l.b16 %v181
    %v442 = vunpack.c.l.b16 %v182
    %v443 = vunpack.c.l.b16 %v183
    %v444 = vunpack.c.l.b16 %v184
    %v445 = vunpack.c.l.b16 %v185
    %v446 = vunpack.c.l.b16 %v186
    %v447 = vunpack.c.l.b16 %v187
    %v448 = vunpack.c.l.b16 %v188
    %v449 = vunpack.c.l.b16 %v189
    %v450 = vunpack.c.l.b16 %v190
    %v451 = vunpack.c.l.b16 %v191
    %v452 = vunpack.c.l.b16 %v192
    %v453 = vunpack.c.l.b16 %v193
    %v454 = vunpack.c.l.b16 %v194
    %v455 = vunpack.c.l.b16 %v195
    %v456 = vunpack.c.l.b16 %v196
    %v457 = vunpack.c.l.b16 %v197
    %v458 = vunpack.c.l.b16 %v198
    %v459 = vunpack.c.l.b16 %v199
    %v460 = vunpack.c.l.b16 %v200
    %v461 = vunpack.c.l.b16 %v201
    %v462 = vunpack.c.l.b16 %v202
    %v463 = vunpack.c.l.b16 %v203
    %v464 = vunpack.c.l.b16 %v204
    %v465 = vunpack.c.l.b16 %v205
    %v466 = vunpack.c.l.b16 %v206
    %v467 = vunpack.c.l.b16 %v207
    %v468 = vunpack.c.l.b16 %v208
    %v469 = vunpack.c.l.b16 %v209
    %v470 = vunpack.c.l.b16 %v210
    %v471 = vunpack.c.l.b16 %v211
    %v472 = vunpack.c.l.b16 %v212
    %v473 = vunpack.c.l.b16 %v213
    %v474 = vunpack.c.l.b16 %v214
    %v475 = vunpack.c.l.b16 %v215
    %v476 = vunpack.c.l.b16 %v216
    %v477 = vunpack.c.l.b16 %v217
    %v478 = vunpack.c.l.b16 %v218
    %v479 = vunpack.c.l.b16 %v219
    %v480 = vpack.c.b16 %v353, %v352
    %v481 = vpack.c.b16 %v355, %v354
    %v482 = vpack.c.b16 %v357, %v356
    %v483 = vpack.c.b16 %v359, %v358
    %v484 = vpack.c.b16 %v361, %v360
    %v485 = vpack.c.b16 %v363, %v362
    %v486 = vpack.c.b16 %v365, %v364
    %v487 = vpack.c.b16 %v367, %v366
    %v488 = vpack.c.b16 %v369, %v368
    %v489 = vpack.c.b16 %v371, %v370
    %v490 = vpack.c.b16 %v373, %v372
    %v491 = vpack.c.b16 %v375, %v374
    %v492 = vpack.c.b16 %v377, %v376
    %v493 = vpack.c.b16 %v379, %v378
    %v494 = vpack.c.b16 %v381, %v380
    %v495 = vpack.c.b16 %v383, %v382
    %v496 = vpack.c.b16 %v385, %v384
    %v497 = vpack.c.b16 %v387, %v386
    %v498 = vpack.c.b16 %v389, %v388
    %v499 = vpack.c.b16 %v391, %v390
    %v500 = vpack.c.b16 %v393, %v392
    %v501 = vpack.c.b16 %v395, %v394
    %v502 = vpack.c.b16 %v397, %v396
    %v503 = vpack.c.b16 %v399, %v398
    %v504 = vpack.c.b16 %v401, %v400
    %v505 = vpack.c.b16 %v403, %v402
    %v506 = vpack.c.b16 %v405, %v404
    %v507 = vpack.c.b16 %v407, %v406
    %v508 = vpack.c.b16 %v409, %v408
    %v509 = vpack.c.b16 %v411, %v410
    %v510 = vpack.c.b16 %v413, %v412
    %v511 = vpack.c.b16 %v415, %v414
    %v512 = vpack.c.b16 %v417, %v416
    %v513 = vpack.c.b16 %v419, %v418
    %v514 = vpack.c.b16 %v421, %v420
    %v515 = vpack.c.b16 %v423, %v422
    %v516 = vpack.c.b16 %v425, %v424
    %v517 = vpack.c.b16 %v427, %v426
    %v518 = vpack.c.b16 %v429, %v428
    %v519 = vpack.c.b16 %v431, %v430
    %v520 = vpack.c.b16 %v433, %v432
    %v521 = vpack.c.b16 %v435, %v434
    %v522 = vpack.c.b16 %v437, %v436
    %v523 = vpack.c.b16 %v439, %v438
    %v524 = vpack.c.b16 %v441, %v440
    %v525 = vpack.c.b16 %v443, %v442
    %v526 = vpack.c.b16 %v445, %v444
    %v527 = vpack.c.b16 %v447, %v446
    %v528 = vpack.c.b16 %v449, %v448
    %v529 = vpack.c.b16 %v451, %v450
    %v530 = vpack.c.b16 %v453, %v452
    %v531 = vpack.c.b16 %v455, %v454
    %v532 = vpack.c.b16 %v457, %v456
    %v533 = vpack.c.b16 %v459, %v458
    %v534 = vpack.c.b16 %v461, %v460
    %v535 = vpack.c.b16 %v463, %v462
    %v536 = vpack.c.b16 %v465, %v464
    %v537 = vpack.c.b16 %v467, %v466
    %v538 = vpack.c.b16 %v469, %v468
    %v539 = vpack.c.b16 %v471, %v470
    %v540 = vpack.c.b16 %v473, %v472
    %v541 = vpack.c.b16 %v475, %v474
    %v542 = vpack.c.b16 %v477, %v476
    %v543 = vpack.c.b16 %v479, %v478
    %608 = vmatpush.bf16.msra.mxu0 %v487
    %609 = vmatpush.bf16.msra.mxu0 %v486
    %610 = vmatpush.bf16.msra.mxu0 %v485
    %611 = vmatpush.bf16.msra.mxu0 %v484
    %612 = vmatpush.bf16.msra.mxu0 %v483
    %613 = vmatpush.bf16.msra.mxu0 %v482
    %614 = vmatpush.bf16.msra.mxu0 %v481
    %615 = vmatpush.bf16.msra.mxu0 %v480
    %616 = vmatmul.bf16.gmra.mxu0 %v84
    %v617 = vpop.f32.mrf.mxu0
    %v618 = vadd.f32 %v222, %v617
    %v619 = vpop.f32.mrf.mxu0
    %620 = vdwg.mxu0
    %621 = vmatpush.bf16.msra.mxu0 %v495
    %622 = vmatpush.bf16.msra.mxu0 %v494
    %623 = vmatpush.bf16.msra.mxu0 %v493
    %624 = vmatpush.bf16.msra.mxu0 %v492
    %625 = vmatpush.bf16.msra.mxu0 %v491
    %626 = vmatpush.bf16.msra.mxu0 %v490
    %627 = vmatpush.bf16.msra.mxu0 %v489
    %628 = vmatpush.bf16.msra.mxu0 %v488
    %629 = vmatmul.bf16.gmra.mxu0 %v85
    %v630 = vpop.f32.mrf.mxu0
    %v631 = vadd.f32 %v618, %v630
    %v632 = vpop.f32.mrf.mxu0
    %633 = vdwg.mxu0
    %634 = vmatpush.bf16.msra.mxu0 %v503
    %635 = vmatpush.bf16.msra.mxu0 %v502
    %636 = vmatpush.bf16.msra.mxu0 %v501
    %637 = vmatpush.bf16.msra.mxu0 %v500
    %638 = vmatpush.bf16.msra.mxu0 %v499
    %639 = vmatpush.bf16.msra.mxu0 %v498
    %640 = vmatpush.bf16.msra.mxu0 %v497
    %641 = vmatpush.bf16.msra.mxu0 %v496
    %642 = vmatmul.bf16.gmra.mxu0 %v86
    %v643 = vpop.f32.mrf.mxu0
    %v644 = vadd.f32 %v631, %v643
    %v645 = vpop.f32.mrf.mxu0
    %646 = vdwg.mxu0
    %647 = vmatpush.bf16.msra.mxu0 %v511
    %648 = vmatpush.bf16.msra.mxu0 %v510
    %649 = vmatpush.bf16.msra.mxu0 %v509
    %650 = vmatpush.bf16.msra.mxu0 %v508
    %651 = vmatpush.bf16.msra.mxu0 %v507
    %652 = vmatpush.bf16.msra.mxu0 %v506
    %653 = vmatpush.bf16.msra.mxu0 %v505
    %654 = vmatpush.bf16.msra.mxu0 %v504
    %655 = vmatmul.bf16.gmra.mxu0 %v87
    %v656 = vpop.f32.mrf.mxu0
    %v657 = vadd.f32 %v644, %v656
    %v658 = vpop.f32.mrf.mxu0
    %659 = vdwg.mxu0
    %660 = vmatpush.bf16.msra.mxu0 %v519
    %661 = vmatpush.bf16.msra.mxu0 %v518
    %662 = vmatpush.bf16.msra.mxu0 %v517
    %663 = vmatpush.bf16.msra.mxu0 %v516
    %664 = vmatpush.bf16.msra.mxu0 %v515
    %665 = vmatpush.bf16.msra.mxu0 %v514
    %666 = vmatpush.bf16.msra.mxu0 %v513
    %667 = vmatpush.bf16.msra.mxu0 %v512
    %668 = vmatmul.bf16.gmra.mxu0 %v88
    %v669 = vpop.f32.mrf.mxu0
    %v670 = vadd.f32 %v657, %v669
    %v671 = vpop.f32.mrf.mxu0
    %672 = vdwg.mxu0
    %673 = vmatpush.bf16.msra.mxu0 %v527
    %674 = vmatpush.bf16.msra.mxu0 %v526
    %675 = vmatpush.bf16.msra.mxu0 %v525
    %676 = vmatpush.bf16.msra.mxu0 %v524
    %677 = vmatpush.bf16.msra.mxu0 %v523
    %678 = vmatpush.bf16.msra.mxu0 %v522
    %679 = vmatpush.bf16.msra.mxu0 %v521
    %680 = vmatpush.bf16.msra.mxu0 %v520
    %681 = vmatmul.bf16.gmra.mxu0 %v89
    %v682 = vpop.f32.mrf.mxu0
    %v683 = vadd.f32 %v670, %v682
    %v684 = vpop.f32.mrf.mxu0
    %685 = vdwg.mxu0
    %686 = vmatpush.bf16.msra.mxu0 %v535
    %687 = vmatpush.bf16.msra.mxu0 %v534
    %688 = vmatpush.bf16.msra.mxu0 %v533
    %689 = vmatpush.bf16.msra.mxu0 %v532
    %690 = vmatpush.bf16.msra.mxu0 %v531
    %691 = vmatpush.bf16.msra.mxu0 %v530
    %692 = vmatpush.bf16.msra.mxu0 %v529
    %693 = vmatpush.bf16.msra.mxu0 %v528
    %694 = vmatmul.bf16.gmra.mxu0 %v90
    %v695 = vpop.f32.mrf.mxu0
    %v696 = vadd.f32 %v683, %v695
    %v697 = vpop.f32.mrf.mxu0
    %698 = vdwg.mxu0
    %699 = vmatpush.bf16.msra.mxu0 %v543
    %700 = vmatpush.bf16.msra.mxu0 %v542
    %701 = vmatpush.bf16.msra.mxu0 %v541
    %702 = vmatpush.bf16.msra.mxu0 %v540
    %703 = vmatpush.bf16.msra.mxu0 %v539
    %704 = vmatpush.bf16.msra.mxu0 %v538
    %705 = vmatpush.bf16.msra.mxu0 %v537
    %706 = vmatpush.bf16.msra.mxu0 %v536
    %707 = vmatmul.bf16.gmra.mxu0 %v91
    %v708 = vpop.f32.mrf.mxu0
    %v709 = vadd.f32 %v696, %v708
    %v710 = vpop.f32.mrf.mxu0
    %711 = vdwg.mxu0
    %v712 = vmax.f32 %v709, 0.0
    %v713 = vpack.c.bf16 %v712, %v712
    %v714 = vld [vmem:[%s3] sm:$0xf]
    %v715 = vld [vmem:[%s3 + $0x4] sm:$0xf]
    %v716 = vld [vmem:[%s3 + $0x8] sm:$0xf]
    %v717 = vld [vmem:[%s3 + $0xc] sm:$0xf]
    %v718 = vld [vmem:[%s3 + $0x10] sm:$0xf]
    %v719 = vld [vmem:[%s3 + $0x14] sm:$0xf]
    %v720 = vld [vmem:[%s3 + $0x18] sm:$0xf]
    %v721 = vld [vmem:[%s3 + $0x1c] sm:$0xf]
    %v722 = vld [vmem:[%s3 + $0x20] sm:$0xf]
    %v723 = vld [vmem:[%s3 + $0x24] sm:$0xf]
    %v724 = vld [vmem:[%s3 + $0x28] sm:$0xf]
    %v725 = vld [vmem:[%s3 + $0x2c] sm:$0xf]
    %v726 = vld [vmem:[%s3 + $0x30] sm:$0xf]
    %v727 = vld [vmem:[%s3 + $0x34] sm:$0xf]
    %v728 = vld [vmem:[%s3 + $0x38] sm:$0xf]
    %v729 = vld [vmem:[%s3 + $0x3c] sm:$0xf]
    %v730 = vld [vmem:[%s4] sm:$0x1]
    %v732 = vperm.slane %v730, 0
    %v750 = vunpack.c.l.b16 %v714
    %v751 = vunpack.c.l.b16 %v715
    %v752 = vunpack.c.l.b16 %v716
    %v753 = vunpack.c.l.b16 %v717
    %v754 = vunpack.c.l.b16 %v718
    %v755 = vunpack.c.l.b16 %v719
    %v756 = vunpack.c.l.b16 %v720
    %v757 = vunpack.c.l.b16 %v721
    %v758 = vunpack.c.l.b16 %v722
    %v759 = vunpack.c.l.b16 %v723
    %v760 = vunpack.c.l.b16 %v724
    %v761 = vunpack.c.l.b16 %v725
    %v762 = vunpack.c.l.b16 %v726
    %v763 = vunpack.c.l.b16 %v727
    %v764 = vunpack.c.l.b16 %v728
    %v765 = vunpack.c.l.b16 %v729
    %v766 = vpack.c.b16 %v751, %v750
    %v767 = vpack.c.b16 %v753, %v752
    %v768 = vpack.c.b16 %v755, %v754
    %v769 = vpack.c.b16 %v757, %v756
    %v770 = vpack.c.b16 %v759, %v758
    %v771 = vpack.c.b16 %v761, %v760
    %v772 = vpack.c.b16 %v763, %v762
    %v773 = vpack.c.b16 %v765, %v764
    %782 = vmatpush.bf16.msra.mxu0 %v773
    %783 = vmatpush.bf16.msra.mxu0 %v772
    %784 = vmatpush.bf16.msra.mxu0 %v771
    %785 = vmatpush.bf16.msra.mxu0 %v770
    %786 = vmatpush.bf16.msra.mxu0 %v769
    %787 = vmatpush.bf16.msra.mxu0 %v768
    %788 = vmatpush.bf16.msra.mxu0 %v767
    %789 = vmatpush.bf16.msra.mxu0 %v766
    %790 = vmatmul.bf16.gmra.mxu0 %v713
    %v791 = vpop.f32.mrf.mxu0
    %v792 = vadd.f32 %v732, %v791
    %v793 = vpop.f32.mrf.mxu0
    %794 = vdwg.mxu0
    %795 = vmax.xlane.f32.xlu0 %v792
    %v796 = vpop.xlane.xlu0 %795
    %v797 = vsub.f32 %v792, %v796
    %v798 = vmul.f32 %v797, 1.442695
    %v799 = vpow.pop %v798
    %800 = vadd.xlane.f32.xlu0 %v799
    %v801 = vpop.xlane.xlu0 %800
    %v802 = vlog2.pop %v801
    %v803 = vmul.f32 %v802, 0.6931472
    %v804 = vsub.f32 %v797, %v803
    %805 = vst [vmem:[#allocation5] sm:$0xff] %v804
    // Predicated region
    $region26: #{_dnn_pallas.1} parent=1 // pred_check
      _
    $region27: #{_dnn_pallas.1} parent=1 // pred_check_branch
      %807 = sbr.rel (0) target = $region29
    $region28: #{_dnn_pallas.1} parent=1 // pred_region
      %809 = vsyncadd [#allocation4], 96
      %s810 = sshll.u32 [#allocation5], 4
      %s811 = int_to_ptr.vmem [resolvable:$true] %s810
      %s812 = sshll.u32 %s5, 4
      %s813 = int_to_ptr.hbm [resolvable:$true] %s812
      %818 = dma.vmem_to_hbm [thread:$0]  %s811, 32, %s813, [#allocation4], 32, 32, 2
    $region29: #{_dnn_pallas.1} parent=1 // pred_fallthru
      _
    // Predicated region
    $region30: #{_dnn_pallas.1} parent=1 // pred_check
      _
    $region31: #{_dnn_pallas.1} parent=1 // pred_check_branch
      %820 = sbr.rel (0) target = $region33
    $region32: #{_dnn_pallas.1} parent=1 // pred_region
      %822 = dma.done [#allocation4], 128
    $region33: #{_dnn_pallas.1} parent=1 // pred_fallthru
      _
    %823 = vsyncpa [#allocation3], 1
    %824 = vsyncpa [#allocation4], 1

</llo_original>
